<compile_context>
chip_gen: v7x
topology: tpu7x:2x2x1
jax: 0.10.0
libtpu: 0.0.40
codegen_flags: <defaults>
</compile_context>

<pallas_src>
import jax
import jax.numpy as jnp
from jax.experimental import pallas as pl
from jax.experimental.pallas import tpu as pltpu


def _round_up(x, m):
    return ((x + m - 1) // m) * m


def _pad2(x, rows, cols):
    return jnp.pad(x, ((0, rows - x.shape[0]), (0, cols - x.shape[1])))


# --------------------------------------------------------------------------
# Small-graph path: the whole forward in ONE resident kernel (no grid).
# --------------------------------------------------------------------------
def _make_fused_kernel(reverse):
    def kernel(y_ref, adj_ref, w1_ref, b1_ref, w2_ref, b2_ref,
               w3_ref, b3_ref, w4_ref, b4_ref, h_ref):
        # pre-FNN: msg = relu( relu(y @ w1 + b1) @ w2 + b2 )
        t = jnp.dot(y_ref[...], w1_ref[...], preferred_element_type=jnp.float32)
        t = jnp.maximum(t + b1_ref[...], 0.0)
        m = jnp.dot(t.astype(jnp.bfloat16), w2_ref[...],
                    preferred_element_type=jnp.float32)
        msg = jnp.maximum(m + b2_ref[...], 0.0).astype(jnp.bfloat16)

        # aggregation: z = adj @ msg (forward) or adj^T @ msg (reverse).
        # int8 -> f32 -> bf16 upcast rides the VPU; MXU sees bf16 x bf16.
        adj = adj_ref[...].astype(jnp.float32).astype(jnp.bfloat16)
        if reverse:
            z = jax.lax.dot_general(
                adj, msg, dimension_numbers=(((0,), (0,)), ((), ())),
                preferred_element_type=jnp.float32)
        else:
            z = jnp.dot(adj, msg, preferred_element_type=jnp.float32)

        # update-FNN: h = relu( relu(z @ w3 + b3) @ w4 + b4 )
        u = jnp.dot(z.astype(jnp.bfloat16), w3_ref[...],
                    preferred_element_type=jnp.float32)
        u = jnp.maximum(u + b3_ref[...], 0.0)
        h = jnp.dot(u.astype(jnp.bfloat16), w4_ref[...],
                    preferred_element_type=jnp.float32)
        h_ref[...] = jnp.maximum(h + b4_ref[...], 0.0).astype(h_ref.dtype)
    return kernel


# --------------------------------------------------------------------------
# Large-graph stage 1: msg = relu(FNN_pre(y)), computed once over row tiles.
# --------------------------------------------------------------------------
def _pre_mlp_kernel(y_ref, w1_ref, b1_ref, w2_ref, b2_ref, msg_ref):
    t = jnp.dot(y_ref[...], w1_ref[...], preferred_element_type=jnp.float32)
    t = jnp.maximum(t + b1_ref[...], 0.0)
    m = jnp.dot(t.astype(jnp.bfloat16), w2_ref[...],
                preferred_element_type=jnp.float32)
    m = jnp.maximum(m + b2_ref[...], 0.0)
    msg_ref[...] = m.astype(msg_ref.dtype)


# --------------------------------------------------------------------------
# Large-graph stage 2: z = adj @ msg (int8->bf16 MXU, f32 accumulator),
# fused with h = relu(FNN_update(z)) on the last reduction step.
# --------------------------------------------------------------------------
def _make_agg_kernel(reverse, tile_k, msg_resident):
    def kernel(adj_ref, msg_ref, w3_ref, b3_ref, w4_ref, b4_ref, h_ref, acc_ref):
        k = pl.program_id(1)

        @pl.when(k == 0)
        def _init():
            acc_ref[...] = jnp.zeros_like(acc_ref)

        if msg_resident:
            # msg is fully VMEM-resident (fetched once); slice the k-th row band.
            start = pl.multiple_of(k * tile_k, tile_k)
            msg_k = msg_ref[pl.ds(start, tile_k), :]
        else:
            msg_k = msg_ref[...]

        adj_t = adj_ref[...].astype(jnp.float32).astype(jnp.bfloat16)
        if reverse:
            # adj tile is (tile_k, tile_m) = adj[k*, i*]; contracting its axis 0
            # with msg's axis 0 == (adj^T tile) @ msg, without any HBM transpose.
            acc_ref[...] += jax.lax.dot_general(
                adj_t, msg_k, dimension_numbers=(((0,), (0,)), ((), ())),
                preferred_element_type=jnp.float32)
        else:
            acc_ref[...] += jnp.dot(adj_t, msg_k,
                                    preferred_element_type=jnp.float32)

        @pl.when(k == pl.num_programs(1) - 1)
        def _finalize():
            z = acc_ref[...].astype(jnp.bfloat16)
            u = jnp.dot(z, w3_ref[...], preferred_element_type=jnp.float32)
            u = jnp.maximum(u + b3_ref[...], 0.0)
            h = jnp.dot(u.astype(jnp.bfloat16), w4_ref[...],
                        preferred_element_type=jnp.float32)
            h = jnp.maximum(h + b4_ref[...], 0.0)
            h_ref[...] = h.astype(h_ref.dtype)
    return kernel


def aggregator_forward(adj, y, params, *, reverse=False,
                       tile_m=None, tile_k=None, msg_resident=None,
                       fuse_max_n=1024):
    """adj: (N, N) float32 with adj[dst, src] = #edges src->dst (forward direction).
       y:   (N, node_dim) float32 node features.
       params: w1,b1,w2,b2 (pre FNN) and w3,b3,w4,b4 (update FNN), (in,out) layout.
       NOTE: int8 adjacency storage assumes integer edge counts <= 127."""
    N, node_dim = y.shape
    hid1 = params["w1"].shape[1]
    emb_dim = params["w2"].shape[1]
    hid2 = params["w3"].shape[1]
    out_dim = params["w4"].shape[1]

    # ---- lane-pad all feature dims to 128; weights bf16, biases f32 ----
    node_p = _round_up(node_dim, 128)
    hid1_p = _round_up(hid1, 128)
    emb_p = _round_up(emb_dim, 128)
    hid2_p = _round_up(hid2, 128)
    out_p = _round_up(out_dim, 128)

    w1 = _pad2(params["w1"], node_p, hid1_p).astype(jnp.bfloat16)
    b1 = _pad2(params["b1"], 1, hid1_p).astype(jnp.float32)
    w2 = _pad2(params["w2"], hid1_p, emb_p).astype(jnp.bfloat16)
    b2 = _pad2(params["b2"], 1, emb_p).astype(jnp.float32)
    w3 = _pad2(params["w3"], emb_p, hid2_p).astype(jnp.bfloat16)
    b3 = _pad2(params["b3"], 1, hid2_p).astype(jnp.float32)
    w4 = _pad2(params["w4"], hid2_p, out_p).astype(jnp.bfloat16)
    b4 = _pad2(params["b4"], 1, out_p).astype(jnp.float32)

    # Zero padding keeps semantics: padded adj columns (fwd) / rows (rev) are zero,
    # so bias-contaminated msg rows of padded src nodes never contribute to z, and
    # padded dst rows / padded output lanes are sliced off at the end.

    # ---------------- small-graph fused path ----------------
    if tile_m is None and tile_k is None and N <= fuse_max_n:
        n_pad = _round_up(N, 128)
        y_p = _pad2(y, n_pad, node_p).astype(jnp.bfloat16)
        # TODO(synk): cache the padded int8 adjacency per graph; RL rollouts call
        # the Aggregator many times on the same graph (this pad/cast is XLA-side).
        adj_p = _pad2(adj, n_pad, n_pad).astype(jnp.int8)
        h_p = pl.pallas_call(
            _make_fused_kernel(reverse),
            out_shape=jax.ShapeDtypeStruct((n_pad, out_p), jnp.float32),
        )(y_p, adj_p, w1, b1, w2, b2, w3, b3, w4, b4)
        return h_p[:N, :out_dim]

    # ---------------- large-graph tiled path ----------------
    if tile_m is None:
        tile_m = 512                       # >=2 dst tiles -> both v7x TCs engage
    if tile_k is None:
        tile_k = 1024 if N <= 4096 else 2048
    assert tile_m % 128 == 0 and tile_k % 128 == 0

    n_dst_pad = _round_up(N, tile_m)       # output / dst axis
    n_msg_pad = _round_up(N, tile_k)       # contraction / src axis (msg rows)

    if msg_resident is None:
        # keep msg VMEM-resident when its bf16 footprint is small (<= 4 MiB).
        msg_resident = n_msg_pad * emb_p * 2 <= 4 * 1024 * 1024

    y_p = _pad2(y, n_msg_pad, node_p).astype(jnp.bfloat16)
    # TODO(synk): hoist this pad + int8 cast out of the per-forward path and cache
    # it per graph (comparable HBM traffic to the kernel's own adj stream).
    if reverse:
        adj_p = _pad2(adj, n_msg_pad, n_dst_pad).astype(jnp.int8)
        adj_spec = pl.BlockSpec((tile_k, tile_m), lambda i, k: (k, i))
    else:
        adj_p = _pad2(adj, n_dst_pad, n_msg_pad).astype(jnp.int8)
        adj_spec = pl.BlockSpec((tile_m, tile_k), lambda i, k: (i, k))

    # ---- stage 1: msg computed once, stored bf16 for the bf16 MXU matmul ----
    rows = 512 if (tile_k > 512 and tile_k % 512 == 0) else tile_k
    c1 = lambda i: (0, 0)                  # weights/biases: constant index_map
    msg = pl.pallas_call(
        _pre_mlp_kernel,
        out_shape=jax.ShapeDtypeStruct((n_msg_pad, emb_p), jnp.bfloat16),
        grid=(n_msg_pad // rows,),
        in_specs=[
            pl.BlockSpec((rows, node_p), lambda i: (i, 0)),
            pl.BlockSpec((node_p, hid1_p), c1),
            pl.BlockSpec((1, hid1_p), c1),
            pl.BlockSpec((hid1_p, emb_p), c1),
            pl.BlockSpec((1, emb_p), c1),
        ],
        out_specs=pl.BlockSpec((rows, emb_p), lambda i: (i, 0)),
        compiler_params=pltpu.CompilerParams(
            dimension_semantics=("parallel",)),
    )(y_p, w1, b1, w2, b2)

    # ---- stage 2: tiled adj @ msg with fused update MLP ----
    if msg_resident:
        msg_spec = pl.BlockSpec((n_msg_pad, emb_p), lambda i, k: (0, 0))
    else:
        msg_spec = pl.BlockSpec((tile_k, emb_p), lambda i, k: (k, 0))
    c2 = lambda i, k: (0, 0)

    h_p = pl.pallas_call(
        _make_agg_kernel(reverse, tile_k, msg_resident),
        out_shape=jax.ShapeDtypeStruct((n_dst_pad, out_p), jnp.float32),
        grid=(n_dst_pad // tile_m, n_msg_pad // tile_k),
        in_specs=[
            adj_spec,
            msg_spec,
            pl.BlockSpec((emb_p, hid2_p), c2),
            pl.BlockSpec((1, hid2_p), c2),
            pl.BlockSpec((hid2_p, out_p), c2),
            pl.BlockSpec((1, out_p), c2),
        ],
        out_specs=pl.BlockSpec((tile_m, out_p), lambda i, k: (i, 0)),
        scratch_shapes=[pltpu.VMEM((tile_m, emb_p), jnp.float32)],
        compiler_params=pltpu.CompilerParams(
            dimension_semantics=("parallel", "arbitrary"),
            vmem_limit_bytes=32 * 1024 * 1024),   # v5e default scoped is 16 MiB
    )(adj_p, msg, w3, b3, w4, b4)

    return h_p[:N, :out_dim]


# --------------------------------------------------------------------------
# Reference + test harness
# --------------------------------------------------------------------------
def _init_params(key, node_dim, emb_dim, out_dim):
    ks = jax.random.split(key, 8)
    scale = 0.1
    return {
        # FNN_pre: node_dim -> node_dim -> emb_dim
        "w1": scale * jax.random.normal(ks[0], (node_dim, node_dim), jnp.float32),
        "b1": scale * jax.random.normal(ks[1], (1, node_dim), jnp.float32),
        "w2": scale * jax.random.normal(ks[2], (node_dim, emb_dim), jnp.float32),
        "b2": scale * jax.random.normal(ks[3], (1, emb_dim), jnp.float32),
        # FNN_update: emb_dim -> emb_dim -> out_dim
        "w3": scale * jax.random.normal(ks[4], (emb_dim, emb_dim), jnp.float32),
        "b3": scale * jax.random.normal(ks[5], (1, emb_dim), jnp.float32),
        "w4": scale * jax.random.normal(ks[6], (emb_dim, out_dim), jnp.float32),
        "b4": scale * jax.random.normal(ks[7], (1, out_dim), jnp.float32),
    }


def _reference(adj, y, p, reverse=False):
    if reverse:
        adj = adj.T
    t = jnp.maximum(y @ p["w1"] + p["b1"], 0.0)
    msg = jnp.maximum(t @ p["w2"] + p["b2"], 0.0)
    z = adj @ msg
    u = jnp.maximum(z @ p["w3"] + p["b3"], 0.0)
    return jnp.maximum(u @ p["w4"] + p["b4"], 0.0)


if __name__ == "__main__":
    key = jax.random.PRNGKey(0)
    k1, k2 = jax.random.split(key)

    def make_case(N, node_dim, emb_dim, out_dim, edge_p, subkey):
        k_feat, k_adj, k_par = jax.random.split(subkey, 3)
        y = jax.random.normal(k_feat, (N, node_dim), jnp.float32)
        adj = (jax.random.uniform(k_adj, (N, N)) < edge_p).astype(jnp.float32)
        adj = adj * (1.0 - jnp.eye(N, dtype=jnp.float32))   # no self loops
        params = _init_params(k_par, node_dim, emb_dim, out_dim)
        return adj, y, params

    def check(h, h_ref, tag):
        assert h.shape == h_ref.shape, tag
        err = float(jnp.linalg.norm(h - h_ref) / (jnp.linalg.norm(h_ref) + 1e-6))
        # bf16 weights/activations + int8 adjacency vs f32 reference.
        assert err < 5e-2, f"{tag}: relative error {err}"

    # Small graph (typical placeto regime) -> fused single-kernel path.
    adj, y, params = make_case(8, 16, 32, 16, 0.3, k1)
    for reverse in (False, True):
        h = aggregator_forward(adj, y, params, reverse=reverse)
        jax.block_until_ready(h)
        check(h, _reference(adj, y, params, reverse), f"fused rev={reverse}")

    # Larger graph forced onto the tiled two-stage path (multi-step reduction grid,
    # both the resident-msg and streaming-msg variants).
    adj, y, params = make_case(300, 16, 32, 16, 0.05, k2)
    for reverse in (False, True):
        for resident in (True, False):
            h = aggregator_forward(adj, y, params, reverse=reverse,
                                   tile_m=128, tile_k=128, msg_resident=resident)
            jax.block_until_ready(h)
            check(h, _reference(adj, y, params, reverse),
                  f"tiled rev={reverse} resident={resident}")

    print("KERNEL_OK")
</pallas_src>

<mosaic_0001>
module attributes {stable_mosaic.version = 11 : i64} {
  func.func @kernel(%arg0: memref<128x128xbf16, #tpu.memory_space<vmem>>, %arg1: memref<128x128xi8, #tpu.memory_space<vmem>>, %arg2: memref<128x128xbf16, #tpu.memory_space<vmem>>, %arg3: memref<1x128xf32, #tpu.memory_space<vmem>>, %arg4: memref<128x128xbf16, #tpu.memory_space<vmem>>, %arg5: memref<1x128xf32, #tpu.memory_space<vmem>>, %arg6: memref<128x128xbf16, #tpu.memory_space<vmem>>, %arg7: memref<1x128xf32, #tpu.memory_space<vmem>>, %arg8: memref<128x128xbf16, #tpu.memory_space<vmem>>, %arg9: memref<1x128xf32, #tpu.memory_space<vmem>>, %arg10: memref<128x128xf32, #tpu.memory_space<vmem>>) attributes {dimension_semantics = [], scalar_prefetch = 0 : i64, scratch_operands = 0 : i64, tpu.core_type = #tpu.core_type<tc>} {
    %c0 = arith.constant 0 : index
    %c0_0 = arith.constant 0 : index
    %0 = vector.load %arg0[%c0, %c0_0] : memref<128x128xbf16, #tpu.memory_space<vmem>>, vector<128x128xbf16>
    %c0_1 = arith.constant 0 : index
    %c0_2 = arith.constant 0 : index
    %1 = vector.load %arg2[%c0_1, %c0_2] : memref<128x128xbf16, #tpu.memory_space<vmem>>, vector<128x128xbf16>
    %cst = arith.constant dense<0.000000e+00> : vector<128x128xf32>
    %2 = tpu.matmul %0, %1, %cst {dimension_numbers = #tpu.dot_dimension_numbers<[1], [0], [0], [1], [0, 0, 1, 1], [], []>} : vector<128x128xbf16>, vector<128x128xbf16>, vector<128x128xf32> -> vector<128x128xf32>
    %c0_3 = arith.constant 0 : index
    %c0_4 = arith.constant 0 : index
    %3 = vector.load %arg3[%c0_3, %c0_4] : memref<1x128xf32, #tpu.memory_space<vmem>>, vector<1x128xf32>
    %4 = vector.broadcast %3 : vector<1x128xf32> to vector<128x128xf32>
    %5 = arith.addf %2, %4 : vector<128x128xf32>
    %cst_5 = arith.constant 0.000000e+00 : f32
    %6 = vector.broadcast %cst_5 : f32 to vector<128x128xf32>
    %7 = arith.maximumf %5, %6 : vector<128x128xf32>
    %8 = arith.truncf %7 : vector<128x128xf32> to vector<128x128xbf16>
    %c0_6 = arith.constant 0 : index
    %c0_7 = arith.constant 0 : index
    %9 = vector.load %arg4[%c0_6, %c0_7] : memref<128x128xbf16, #tpu.memory_space<vmem>>, vector<128x128xbf16>
    %cst_8 = arith.constant dense<0.000000e+00> : vector<128x128xf32>
    %10 = tpu.matmul %8, %9, %cst_8 {dimension_numbers = #tpu.dot_dimension_numbers<[1], [0], [0], [1], [0, 0, 1, 1], [], []>} : vector<128x128xbf16>, vector<128x128xbf16>, vector<128x128xf32> -> vector<128x128xf32>
    %c0_9 = arith.constant 0 : index
    %c0_10 = arith.constant 0 : index
    %11 = vector.load %arg5[%c0_9, %c0_10] : memref<1x128xf32, #tpu.memory_space<vmem>>, vector<1x128xf32>
    %12 = vector.broadcast %11 : vector<1x128xf32> to vector<128x128xf32>
    %13 = arith.addf %10, %12 : vector<128x128xf32>
    %cst_11 = arith.constant 0.000000e+00 : f32
    %14 = vector.broadcast %cst_11 : f32 to vector<128x128xf32>
    %15 = arith.maximumf %13, %14 : vector<128x128xf32>
    %16 = arith.truncf %15 : vector<128x128xf32> to vector<128x128xbf16>
    %c0_12 = arith.constant 0 : index
    %c0_13 = arith.constant 0 : index
    %17 = vector.load %arg1[%c0_12, %c0_13] : memref<128x128xi8, #tpu.memory_space<vmem>>, vector<128x128xi8>
    %18 = arith.sitofp %17 : vector<128x128xi8> to vector<128x128xf32>
    %19 = arith.truncf %18 : vector<128x128xf32> to vector<128x128xbf16>
    %cst_14 = arith.constant dense<0.000000e+00> : vector<128x128xf32>
    %20 = tpu.matmul %19, %16, %cst_14 {dimension_numbers = #tpu.dot_dimension_numbers<[1], [0], [0], [1], [0, 0, 1, 1], [], []>} : vector<128x128xbf16>, vector<128x128xbf16>, vector<128x128xf32> -> vector<128x128xf32>
    %21 = arith.truncf %20 : vector<128x128xf32> to vector<128x128xbf16>
    %c0_15 = arith.constant 0 : index
    %c0_16 = arith.constant 0 : index
    %22 = vector.load %arg6[%c0_15, %c0_16] : memref<128x128xbf16, #tpu.memory_space<vmem>>, vector<128x128xbf16>
    %cst_17 = arith.constant dense<0.000000e+00> : vector<128x128xf32>
    %23 = tpu.matmul %21, %22, %cst_17 {dimension_numbers = #tpu.dot_dimension_numbers<[1], [0], [0], [1], [0, 0, 1, 1], [], []>} : vector<128x128xbf16>, vector<128x128xbf16>, vector<128x128xf32> -> vector<128x128xf32>
    %c0_18 = arith.constant 0 : index
    %c0_19 = arith.constant 0 : index
    %24 = vector.load %arg7[%c0_18, %c0_19] : memref<1x128xf32, #tpu.memory_space<vmem>>, vector<1x128xf32>
    %25 = vector.broadcast %24 : vector<1x128xf32> to vector<128x128xf32>
    %26 = arith.addf %23, %25 : vector<128x128xf32>
    %cst_20 = arith.constant 0.000000e+00 : f32
    %27 = vector.broadcast %cst_20 : f32 to vector<128x128xf32>
    %28 = arith.maximumf %26, %27 : vector<128x128xf32>
    %29 = arith.truncf %28 : vector<128x128xf32> to vector<128x128xbf16>
    %c0_21 = arith.constant 0 : index
    %c0_22 = arith.constant 0 : index
    %30 = vector.load %arg8[%c0_21, %c0_22] : memref<128x128xbf16, #tpu.memory_space<vmem>>, vector<128x128xbf16>
    %cst_23 = arith.constant dense<0.000000e+00> : vector<128x128xf32>
    %31 = tpu.matmul %29, %30, %cst_23 {dimension_numbers = #tpu.dot_dimension_numbers<[1], [0], [0], [1], [0, 0, 1, 1], [], []>} : vector<128x128xbf16>, vector<128x128xbf16>, vector<128x128xf32> -> vector<128x128xf32>
    %c0_24 = arith.constant 0 : index
    %c0_25 = arith.constant 0 : index
    %32 = vector.load %arg9[%c0_24, %c0_25] : memref<1x128xf32, #tpu.memory_space<vmem>>, vector<1x128xf32>
    %33 = vector.broadcast %32 : vector<1x128xf32> to vector<128x128xf32>
    %34 = arith.addf %31, %33 : vector<128x128xf32>
    %cst_26 = arith.constant 0.000000e+00 : f32
    %35 = vector.broadcast %cst_26 : f32 to vector<128x128xf32>
    %36 = arith.maximumf %34, %35 : vector<128x128xf32>
    %c0_27 = arith.constant 0 : index
    %c0_28 = arith.constant 0 : index
    %37 = vector.load %arg10[%c0_27, %c0_28] : memref<128x128xf32, #tpu.memory_space<vmem>>, vector<128x128xf32>
    tpu.vector_store %arg10[%c0_27, %c0_28], %36 {strides = array<i32>} : memref<128x128xf32, #tpu.memory_space<vmem>>, vector<128x128xf32>,
    return
  }
}

</mosaic_0001>

<llo_original>
// kernel: tpu_custom_call.1
$region0: #{tpu_custom_call.1}
  #allocation0 [shape = 'u32[]', space=smem, size = 0x4, offset = 0x4, fixed_abs, tag = 'smem constant byte address 0x4 - core index']
  #allocation1 [shape = 'u32[144,128]{1,0:T(1,128)}', space=vmem, size = 0x12000, scoped, tag = 'internal scratch']
  %s0 = inlined_call_operand.hbm [shape: bf16[128,128], index: 0, kind: input, shape index: {}]
  %s1 = inlined_call_operand.hbm [shape: s8[128,128], index: 1, kind: input, shape index: {}]
  %s2 = inlined_call_operand.hbm [shape: bf16[128,128], index: 2, kind: input, shape index: {}]
  %s3 = inlined_call_operand.vmem [shape: f32[1,128], index: 3, kind: input, shape index: {}]
  %s4 = inlined_call_operand.hbm [shape: bf16[128,128], index: 4, kind: input, shape index: {}]
  %s5 = inlined_call_operand.vmem [shape: f32[1,128], index: 5, kind: input, shape index: {}]
  %s6 = inlined_call_operand.hbm [shape: bf16[128,128], index: 6, kind: input, shape index: {}]
  %s7 = inlined_call_operand.vmem [shape: f32[1,128], index: 7, kind: input, shape index: {}]
  %s8 = inlined_call_operand.hbm [shape: bf16[128,128], index: 8, kind: input, shape index: {}]
  %s9 = inlined_call_operand.vmem [shape: f32[1,128], index: 9, kind: input, shape index: {}]
  %s10 = inlined_call_operand.hbm [shape: f32[128,128], index: 10, kind: output, shape index: {}]
  %s11 = sld [smem:[#allocation0]]
  $region74: #{tpu_custom_call.1} parent=0
    _
  %s13 = ssub.s32 1, %s11
  %s14 = scalar_select 0, %s13, %s11
  $region1: #{tpu_custom_call.1} parent=0
    #allocation2 [shape = 'u8[32768]{0}', space=vmem, size = 0x8000, scoped, tag = 'input window, operand 0, single buffered']
    #allocation3 [shape = 's32[1]{0}', space=sflag, size = 0x4, scoped, tag = 'scoped memory for tpu_custom_call.1']
    #allocation4 [shape = 's32[1]{0}', space=sflag, size = 0x4, scoped, tag = 'scoped memory for tpu_custom_call.1']
    #allocation5 [shape = 'u8[16384]{0}', space=vmem, size = 0x4000, scoped, tag = 'input window, operand 1, single buffered']
    #allocation6 [shape = 's32[1]{0}', space=sflag, size = 0x4, scoped, tag = 'scoped memory for tpu_custom_call.1']
    #allocation7 [shape = 'u8[32768]{0}', space=vmem, size = 0x8000, scoped, tag = 'input window, operand 2, single buffered']
    #allocation8 [shape = 'u8[32768]{0}', space=vmem, size = 0x8000, scoped, tag = 'input window, operand 4, single buffered']
    #allocation9 [shape = 's32[1]{0}', space=sflag, size = 0x4, scoped, tag = 'scoped memory for tpu_custom_call.1']
    #allocation10 [shape = 'u8[32768]{0}', space=vmem, size = 0x8000, scoped, tag = 'input window, operand 6, single buffered']
    #allocation11 [shape = 'u8[32768]{0}', space=vmem, size = 0x8000, scoped, tag = 'input window, operand 8, single buffered']
    #allocation12 [shape = 's32[1]{0}', space=sflag, size = 0x4, scoped, tag = 'scoped memory for tpu_custom_call.1']
    #allocation13 [shape = 'u8[65536]{0}', space=vmem, size = 0x10000, scoped, tag = 'output window, operand 0, single buffered']
    %15 = vsyncpa [#allocation3], 0
    %16 = vsyncpa [#allocation6], 0
    %17 = vsyncpa [#allocation9], 0
    %18 = vsyncpa [#allocation12], 0
    %19 = vsyncpa [#allocation4], 0
    // Predicated region
    $region2: #{tpu_custom_call.1} parent=1 // pred_check
      _
    $region3: #{tpu_custom_call.1} parent=1 // pred_check_branch
      %21 = sbr.rel (0) target = $region5
    $region4: #{tpu_custom_call.1} parent=1 // pred_region
      %s23 = ssub.s32 1024, 1024
      %24 = vsyncadd [#allocation3], %s23
      %s25 = sshll.u32 [#allocation2], 4
      %s26 = int_to_ptr.vmem [resolvable:$true] %s25
      %31 = dma.hbm_to_vmem [thread:$0]  %s0, 1024, %s26, [#allocation3], 64, 64, 4
    $region5: #{tpu_custom_call.1} parent=1 // pred_fallthru
      _
    // Predicated region
    $region6: #{tpu_custom_call.1} parent=1 // pred_check
      _
    $region7: #{tpu_custom_call.1} parent=1 // pred_check_branch
      %33 = sbr.rel (0) target = $region9
    $region8: #{tpu_custom_call.1} parent=1 // pred_region
      %s35 = ssub.s32 512, 512
      %36 = vsyncadd [#allocation6], %s35
      %s37 = sshll.u32 [#allocation5], 4
      %s38 = int_to_ptr.vmem [resolvable:$true] %s37
      %43 = dma.hbm_to_vmem [thread:$0]  %s1, 512, %s38, [#allocation6], 128, 128, 8
    $region9: #{tpu_custom_call.1} parent=1 // pred_fallthru
      _
    // Predicated region
    $region10: #{tpu_custom_call.1} parent=1 // pred_check
      _
    $region11: #{tpu_custom_call.1} parent=1 // pred_check_branch
      %45 = sbr.rel (0) target = $region13
    $region12: #{tpu_custom_call.1} parent=1 // pred_region
      %s47 = ssub.s32 1024, 1024
      %48 = vsyncadd [#allocation6], %s47
      %s49 = sshll.u32 [#allocation7], 4
      %s50 = int_to_ptr.vmem [resolvable:$true] %s49
      %55 = dma.hbm_to_vmem [thread:$0]  %s2, 1024, %s50, [#allocation6], 64, 64, 4
    $region13: #{tpu_custom_call.1} parent=1 // pred_fallthru
      _
    // Predicated region
    $region14: #{tpu_custom_call.1} parent=1 // pred_check
      _
    $region15: #{tpu_custom_call.1} parent=1 // pred_check_branch
      %57 = sbr.rel (0) target = $region17
    $region16: #{tpu_custom_call.1} parent=1 // pred_region
      _
    $region17: #{tpu_custom_call.1} parent=1 // pred_fallthru
      _
    // Predicated region
    $region18: #{tpu_custom_call.1} parent=1 // pred_check
      _
    $region19: #{tpu_custom_call.1} parent=1 // pred_check_branch
      %59 = sbr.rel (0) target = $region21
    $region20: #{tpu_custom_call.1} parent=1 // pred_region
      %s61 = ssub.s32 1024, 1024
      %62 = vsyncadd [#allocation9], %s61
      %s63 = sshll.u32 [#allocation8], 4
      %s64 = int_to_ptr.vmem [resolvable:$true] %s63
      %69 = dma.hbm_to_vmem [thread:$0]  %s4, 1024, %s64, [#allocation9], 64, 64, 4
    $region21: #{tpu_custom_call.1} parent=1 // pred_fallthru
      _
    // Predicated region
    $region22: #{tpu_custom_call.1} parent=1 // pred_check
      _
    $region23: #{tpu_custom_call.1} parent=1 // pred_check_branch
      %71 = sbr.rel (0) target = $region25
    $region24: #{tpu_custom_call.1} parent=1 // pred_region
      _
    $region25: #{tpu_custom_call.1} parent=1 // pred_fallthru
      _
    // Predicated region
    $region26: #{tpu_custom_call.1} parent=1 // pred_check
      _
    $region27: #{tpu_custom_call.1} parent=1 // pred_check_branch
      %73 = sbr.rel (0) target = $region29
    $region28: #{tpu_custom_call.1} parent=1 // pred_region
      %s75 = ssub.s32 1024, 1024
      %76 = vsyncadd [#allocation9], %s75
      %s77 = sshll.u32 [#allocation10], 4
      %s78 = int_to_ptr.vmem [resolvable:$true] %s77
      %83 = dma.hbm_to_vmem [thread:$0]  %s6, 1024, %s78, [#allocation9], 64, 64, 4
    $region29: #{tpu_custom_call.1} parent=1 // pred_fallthru
      _
    // Predicated region
    $region30: #{tpu_custom_call.1} parent=1 // pred_check
      _
    $region31: #{tpu_custom_call.1} parent=1 // pred_check_branch
      %85 = sbr.rel (0) target = $region33
    $region32: #{tpu_custom_call.1} parent=1 // pred_region
      _
    $region33: #{tpu_custom_call.1} parent=1 // pred_fallthru
      _
    // Predicated region
    $region34: #{tpu_custom_call.1} parent=1 // pred_check
      _
    $region35: #{tpu_custom_call.1} parent=1 // pred_check_branch
      %87 = sbr.rel (0) target = $region37
    $region36: #{tpu_custom_call.1} parent=1 // pred_region
      %s89 = ssub.s32 1024, 1024
      %90 = vsyncadd [#allocation12], %s89
      %s91 = sshll.u32 [#allocation11], 4
      %s92 = int_to_ptr.vmem [resolvable:$true] %s91
      %97 = dma.hbm_to_vmem [thread:$0]  %s8, 1024, %s92, [#allocation12], 64, 64, 4
    $region37: #{tpu_custom_call.1} parent=1 // pred_fallthru
      _
    // Predicated region
    $region38: #{tpu_custom_call.1} parent=1 // pred_check
      _
    $region39: #{tpu_custom_call.1} parent=1 // pred_check_branch
      %99 = sbr.rel (0) target = $region41
    $region40: #{tpu_custom_call.1} parent=1 // pred_region
      _
    $region41: #{tpu_custom_call.1} parent=1 // pred_fallthru
      _
    // Predicated region
    $region42: #{tpu_custom_call.1} parent=1 // pred_check
      _
    $region43: #{tpu_custom_call.1} parent=1 // pred_check_branch
      %101 = sbr.rel (0) target = $region45
    $region44: #{tpu_custom_call.1} parent=1 // pred_region
      %102 = dma.done [#allocation3], 1024
    $region45: #{tpu_custom_call.1} parent=1 // pred_fallthru
      _
    // Predicated region
    $region46: #{tpu_custom_call.1} parent=1 // pred_check
      _
    $region47: #{tpu_custom_call.1} parent=1 // pred_check_branch
      %104 = sbr.rel (0) target = $region49
    $region48: #{tpu_custom_call.1} parent=1 // pred_region
      %105 = dma.done [#allocation6], 512
    $region49: #{tpu_custom_call.1} parent=1 // pred_fallthru
      _
    // Predicated region
    $region50: #{tpu_custom_call.1} parent=1 // pred_check
      _
    $region51: #{tpu_custom_call.1} parent=1 // pred_check_branch
      %107 = sbr.rel (0) target = $region53
    $region52: #{tpu_custom_call.1} parent=1 // pred_region
      %108 = dma.done [#allocation6], 1024
    $region53: #{tpu_custom_call.1} parent=1 // pred_fallthru
      _
    // Predicated region
    $region54: #{tpu_custom_call.1} parent=1 // pred_check
      _
    $region55: #{tpu_custom_call.1} parent=1 // pred_check_branch
      %110 = sbr.rel (0) target = $region57
    $region56: #{tpu_custom_call.1} parent=1 // pred_region
      %111 = dma.done [#allocation9], 1024
    $region57: #{tpu_custom_call.1} parent=1 // pred_fallthru
      _
    // Predicated region
    $region58: #{tpu_custom_call.1} parent=1 // pred_check
      _
    $region59: #{tpu_custom_call.1} parent=1 // pred_check_branch
      %113 = sbr.rel (0) target = $region61
    $region60: #{tpu_custom_call.1} parent=1 // pred_region
      %114 = dma.done [#allocation9], 1024
    $region61: #{tpu_custom_call.1} parent=1 // pred_fallthru
      _
    // Predicated region
    $region62: #{tpu_custom_call.1} parent=1 // pred_check
      _
    $region63: #{tpu_custom_call.1} parent=1 // pred_check_branch
      %116 = sbr.rel (0) target = $region65
    $region64: #{tpu_custom_call.1} parent=1 // pred_region
      %117 = dma.done [#allocation12], 1024
    $region65: #{tpu_custom_call.1} parent=1 // pred_fallthru
      _
    %v119 = vld [vmem:[#allocation2] sm:$0xf]
    %v120 = vld [vmem:[#allocation2 + $0x4] sm:$0xf]
    %v121 = vld [vmem:[#allocation2 + $0x8] sm:$0xf]
    %v122 = vld [vmem:[#allocation2 + $0xc] sm:$0xf]
    %v123 = vld [vmem:[#allocation2 + $0x10] sm:$0xf]
    %v124 = vld [vmem:[#allocation2 + $0x14] sm:$0xf]
    %v125 = vld [vmem:[#allocation2 + $0x18] sm:$0xf]
    %v126 = vld [vmem:[#allocation2 + $0x1c] sm:$0xf]
    %v127 = vld [vmem:[#allocation2 + $0x20] sm:$0xf]
    %v128 = vld [vmem:[#allocation2 + $0x24] sm:$0xf]
    %v129 = vld [vmem:[#allocation2 + $0x28] sm:$0xf]
    %v130 = vld [vmem:[#allocation2 + $0x2c] sm:$0xf]
    %v131 = vld [vmem:[#allocation2 + $0x30] sm:$0xf]
    %v132 = vld [vmem:[#allocation2 + $0x34] sm:$0xf]
    %v133 = vld [vmem:[#allocation2 + $0x38] sm:$0xf]
    %v134 = vld [vmem:[#allocation2 + $0x3c] sm:$0xf]
    %v135 = vld [vmem:[#allocation7] sm:$0xf]
    %v136 = vld [vmem:[#allocation7 + $0x4] sm:$0xf]
    %v137 = vld [vmem:[#allocation7 + $0x8] sm:$0xf]
    %v138 = vld [vmem:[#allocation7 + $0xc] sm:$0xf]
    %v139 = vld [vmem:[#allocation7 + $0x10] sm:$0xf]
    %v140 = vld [vmem:[#allocation7 + $0x14] sm:$0xf]
    %v141 = vld [vmem:[#allocation7 + $0x18] sm:$0xf]
    %v142 = vld [vmem:[#allocation7 + $0x1c] sm:$0xf]
    %v143 = vld [vmem:[#allocation7 + $0x20] sm:$0xf]
    %v144 = vld [vmem:[#allocation7 + $0x24] sm:$0xf]
    %v145 = vld [vmem:[#allocation7 + $0x28] sm:$0xf]
    %v146 = vld [vmem:[#allocation7 + $0x2c] sm:$0xf]
    %v147 = vld [vmem:[#allocation7 + $0x30] sm:$0xf]
    %v148 = vld [vmem:[#allocation7 + $0x34] sm:$0xf]
    %v149 = vld [vmem:[#allocation7 + $0x38] sm:$0xf]
    %v150 = vld [vmem:[#allocation7 + $0x3c] sm:$0xf]
    %v151 = vld [vmem:[%s3] sm:$0x1]
    %v153 = vlaneseq
    %v154 = vshrl.u32 %v153, 7
    %v155 = vsub.s32 0, %v154
    %v156 = vrot.slane %v151, %v155
    %v174 = vunpack.c.l.b16 %v119
    %v175 = vunpack.c.l.b16 %v120
    %v176 = vunpack.c.l.b16 %v121
    %v177 = vunpack.c.l.b16 %v122
    %v178 = vunpack.c.l.b16 %v123
    %v179 = vunpack.c.l.b16 %v124
    %v180 = vunpack.c.l.b16 %v125
    %v181 = vunpack.c.l.b16 %v126
    %v182 = vunpack.c.l.b16 %v127
    %v183 = vunpack.c.l.b16 %v128
    %v184 = vunpack.c.l.b16 %v129
    %v185 = vunpack.c.l.b16 %v130
    %v186 = vunpack.c.l.b16 %v131
    %v187 = vunpack.c.l.b16 %v132
    %v188 = vunpack.c.l.b16 %v133
    %v189 = vunpack.c.l.b16 %v134
    %v190 = vpack.c.b16 %v175, %v174
    %v191 = vpack.c.b16 %v177, %v176
    %v192 = vpack.c.b16 %v179, %v178
    %v193 = vpack.c.b16 %v181, %v180
    %v194 = vpack.c.b16 %v183, %v182
    %v195 = vpack.c.b16 %v185, %v184
    %v196 = vpack.c.b16 %v187, %v186
    %v197 = vpack.c.b16 %v189, %v188
    %v222 = vunpack.c.l.b16 %v135
    %v223 = vunpack.c.l.b16 %v136
    %v224 = vunpack.c.l.b16 %v137
    %v225 = vunpack.c.l.b16 %v138
    %v226 = vunpack.c.l.b16 %v139
    %v227 = vunpack.c.l.b16 %v140
    %v228 = vunpack.c.l.b16 %v141
    %v229 = vunpack.c.l.b16 %v142
    %v230 = vunpack.c.l.b16 %v143
    %v231 = vunpack.c.l.b16 %v144
    %v232 = vunpack.c.l.b16 %v145
    %v233 = vunpack.c.l.b16 %v146
    %v234 = vunpack.c.l.b16 %v147
    %v235 = vunpack.c.l.b16 %v148
    %v236 = vunpack.c.l.b16 %v149
    %v237 = vunpack.c.l.b16 %v150
    %v238 = vpack.c.b16 %v223, %v222
    %v239 = vpack.c.b16 %v225, %v224
    %v240 = vpack.c.b16 %v227, %v226
    %v241 = vpack.c.b16 %v229, %v228
    %v242 = vpack.c.b16 %v231, %v230
    %v243 = vpack.c.b16 %v233, %v232
    %v244 = vpack.c.b16 %v235, %v234
    %v245 = vpack.c.b16 %v237, %v236
    %254 = vmatprep.subr.bf16.mxu0 0
    %255 = vmatpush1.bf16.msra.mxu0 %v238
    %256 = vmatprep.subr.bf16.mxu0 0
    %257 = vmatpush1.bf16.msra.mxu0 %v239
    %258 = vmatprep.subr.bf16.mxu0 0
    %259 = vmatpush1.bf16.msra.mxu0 %v240
    %260 = vmatprep.subr.bf16.mxu0 0
    %261 = vmatpush1.bf16.msra.mxu0 %v241
    %262 = vmatprep.subr.bf16.mxu0 0
    %263 = vmatpush1.bf16.msra.mxu0 %v242
    %264 = vmatprep.subr.bf16.mxu0 0
    %265 = vmatpush1.bf16.msra.mxu0 %v243
    %266 = vmatprep.subr.bf16.mxu0 0
    %267 = vmatpush1.bf16.msra.mxu0 %v244
    %268 = vmatprep.subr.bf16.mxu0 0
    %269 = vmatpush1.bf16.msra.mxu0 %v245
    %270 = vmatprep.subr.bf16.mxu0 0
    %271 = vmatpush1.bf16.msra.mxu0 0
    %272 = vmatprep.subr.bf16.mxu0 0
    %273 = vmatpush1.bf16.msra.mxu0 0
    %274 = vmatprep.subr.bf16.mxu0 0
    %275 = vmatpush1.bf16.msra.mxu0 0
    %276 = vmatprep.subr.bf16.mxu0 0
    %277 = vmatpush1.bf16.msra.mxu0 0
    %278 = vmatprep.subr.bf16.mxu0 0
    %279 = vmatpush1.bf16.msra.mxu0 0
    %280 = vmatprep.subr.bf16.mxu0 0
    %281 = vmatpush1.bf16.msra.mxu0 0
    %282 = vmatprep.subr.bf16.mxu0 0
    %283 = vmatpush1.bf16.msra.mxu0 0
    %284 = vmatprep.subr.bf16.mxu0 0
    %285 = vmatpush1.bf16.msra.mxu0 0
    %286 = vmatprep.mubr.bf16.mxu0 0
    %287 = vmatmul.mubr.bf16.gmra.mrb[0].mxu0 %v190
    %v288 = vpop.f32.mrb[0].mxu0
    %v289 = vadd.f32 %v156, %v288
    %v290 = vpop.f32.mrb[0].mxu0
    %v291 = vpop.f32.mrb[0].mxu0
    %v292 = vadd.f32 %v156, %v291
    %v293 = vpop.f32.mrb[0].mxu0
    %294 = vmatprep.mubr.bf16.mxu0 0
    %295 = vmatmul.mubr.bf16.gmra.mrb[0].mxu0 %v191
    %v296 = vpop.f32.mrb[0].mxu0
    %v297 = vadd.f32 %v156, %v296
    %v298 = vpop.f32.mrb[0].mxu0
    %v299 = vpop.f32.mrb[0].mxu0
    %v300 = vadd.f32 %v156, %v299
    %v301 = vpop.f32.mrb[0].mxu0
    %302 = vmatprep.mubr.bf16.mxu0 0
    %303 = vmatmul.mubr.bf16.gmra.mrb[0].mxu0 %v192
    %v304 = vpop.f32.mrb[0].mxu0
    %v305 = vadd.f32 %v156, %v304
    %v306 = vpop.f32.mrb[0].mxu0
    %v307 = vpop.f32.mrb[0].mxu0
    %v308 = vadd.f32 %v156, %v307
    %v309 = vpop.f32.mrb[0].mxu0
    %310 = vmatprep.mubr.bf16.mxu0 0
    %311 = vmatmul.mubr.bf16.gmra.mrb[0].mxu0 %v193
    %v312 = vpop.f32.mrb[0].mxu0
    %v313 = vadd.f32 %v156, %v312
    %v314 = vpop.f32.mrb[0].mxu0
    %v315 = vpop.f32.mrb[0].mxu0
    %v316 = vadd.f32 %v156, %v315
    %v317 = vpop.f32.mrb[0].mxu0
    %318 = vmatprep.mubr.bf16.mxu0 0
    %319 = vmatmul.mubr.bf16.gmra.mrb[0].mxu0 %v194
    %v320 = vpop.f32.mrb[0].mxu0
    %v321 = vadd.f32 %v156, %v320
    %v322 = vpop.f32.mrb[0].mxu0
    %v323 = vpop.f32.mrb[0].mxu0
    %v324 = vadd.f32 %v156, %v323
    %v325 = vpop.f32.mrb[0].mxu0
    %326 = vmatprep.mubr.bf16.mxu0 0
    %327 = vmatmul.mubr.bf16.gmra.mrb[0].mxu0 %v195
    %v328 = vpop.f32.mrb[0].mxu0
    %v329 = vadd.f32 %v156, %v328
    %v330 = vpop.f32.mrb[0].mxu0
    %v331 = vpop.f32.mrb[0].mxu0
    %v332 = vadd.f32 %v156, %v331
    %v333 = vpop.f32.mrb[0].mxu0
    %334 = vmatprep.mubr.bf16.mxu0 0
    %335 = vmatmul.mubr.bf16.gmra.mrb[0].mxu0 %v196
    %v336 = vpop.f32.mrb[0].mxu0
    %v337 = vadd.f32 %v156, %v336
    %v338 = vpop.f32.mrb[0].mxu0
    %v339 = vpop.f32.mrb[0].mxu0
    %v340 = vadd.f32 %v156, %v339
    %v341 = vpop.f32.mrb[0].mxu0
    %342 = vmatprep.mubr.bf16.mxu0 0
    %343 = vmatmul.mubr.bf16.gmra.mrb[0].mxu0 %v197
    %v344 = vpop.f32.mrb[0].mxu0
    %v345 = vadd.f32 %v156, %v344
    %v346 = vpop.f32.mrb[0].mxu0
    %v347 = vpop.f32.mrb[0].mxu0
    %v348 = vadd.f32 %v156, %v347
    %v349 = vpop.f32.mrb[0].mxu0
    %350 = vdwg.mxu0
    %v351 = vmax.f32 %v289, 0.0
    %v352 = vmax.f32 %v292, 0.0
    %v353 = vmax.f32 %v297, 0.0
    %v354 = vmax.f32 %v300, 0.0
    %v355 = vmax.f32 %v305, 0.0
    %v356 = vmax.f32 %v308, 0.0
    %v357 = vmax.f32 %v313, 0.0
    %v358 = vmax.f32 %v316, 0.0
    %v359 = vmax.f32 %v321, 0.0
    %v360 = vmax.f32 %v324, 0.0
    %v361 = vmax.f32 %v329, 0.0
    %v362 = vmax.f32 %v332, 0.0
    %v363 = vmax.f32 %v337, 0.0
    %v364 = vmax.f32 %v340, 0.0
    %v365 = vmax.f32 %v345, 0.0
    %v366 = vmax.f32 %v348, 0.0
    %v367 = vpack.c.bf16 %v352, %v351
    %v368 = vpack.c.bf16 %v354, %v353
    %v369 = vpack.c.bf16 %v356, %v355
    %v370 = vpack.c.bf16 %v358, %v357
    %v371 = vpack.c.bf16 %v360, %v359
    %v372 = vpack.c.bf16 %v362, %v361
    %v373 = vpack.c.bf16 %v364, %v363
    %v374 = vpack.c.bf16 %v366, %v365
    %v375 = vld [vmem:[#allocation8] sm:$0xf]
    %v376 = vld [vmem:[#allocation8 + $0x4] sm:$0xf]
    %v377 = vld [vmem:[#allocation8 + $0x8] sm:$0xf]
    %v378 = vld [vmem:[#allocation8 + $0xc] sm:$0xf]
    %v379 = vld [vmem:[#allocation8 + $0x10] sm:$0xf]
    %v380 = vld [vmem:[#allocation8 + $0x14] sm:$0xf]
    %v381 = vld [vmem:[#allocation8 + $0x18] sm:$0xf]
    %v382 = vld [vmem:[#allocation8 + $0x1c] sm:$0xf]
    %v383 = vld [vmem:[#allocation8 + $0x20] sm:$0xf]
    %v384 = vld [vmem:[#allocation8 + $0x24] sm:$0xf]
    %v385 = vld [vmem:[#allocation8 + $0x28] sm:$0xf]
    %v386 = vld [vmem:[#allocation8 + $0x2c] sm:$0xf]
    %v387 = vld [vmem:[#allocation8 + $0x30] sm:$0xf]
    %v388 = vld [vmem:[#allocation8 + $0x34] sm:$0xf]
    %v389 = vld [vmem:[#allocation8 + $0x38] sm:$0xf]
    %v390 = vld [vmem:[#allocation8 + $0x3c] sm:$0xf]
    %v391 = vld [vmem:[%s5] sm:$0x1]
    %v393 = vlaneseq
    %v394 = vshrl.u32 %v393, 7
    %v395 = vsub.s32 0, %v394
    %v396 = vrot.slane %v391, %v395
    %v414 = vunpack.c.l.b16 %v375
    %v415 = vunpack.c.l.b16 %v376
    %v416 = vunpack.c.l.b16 %v377
    %v417 = vunpack.c.l.b16 %v378
    %v418 = vunpack.c.l.b16 %v379
    %v419 = vunpack.c.l.b16 %v380
    %v420 = vunpack.c.l.b16 %v381
    %v421 = vunpack.c.l.b16 %v382
    %v422 = vunpack.c.l.b16 %v383
    %v423 = vunpack.c.l.b16 %v384
    %v424 = vunpack.c.l.b16 %v385
    %v425 = vunpack.c.l.b16 %v386
    %v426 = vunpack.c.l.b16 %v387
    %v427 = vunpack.c.l.b16 %v388
    %v428 = vunpack.c.l.b16 %v389
    %v429 = vunpack.c.l.b16 %v390
    %v430 = vpack.c.b16 %v415, %v414
    %v431 = vpack.c.b16 %v417, %v416
    %v432 = vpack.c.b16 %v419, %v418
    %v433 = vpack.c.b16 %v421, %v420
    %v434 = vpack.c.b16 %v423, %v422
    %v435 = vpack.c.b16 %v425, %v424
    %v436 = vpack.c.b16 %v427, %v426
    %v437 = vpack.c.b16 %v429, %v428
    %446 = vmatprep.subr.bf16.mxu0 0
    %447 = vmatpush1.bf16.msra.mxu0 %v430
    %448 = vmatprep.subr.bf16.mxu0 0
    %449 = vmatpush1.bf16.msra.mxu0 %v431
    %450 = vmatprep.subr.bf16.mxu0 0
    %451 = vmatpush1.bf16.msra.mxu0 %v432
    %452 = vmatprep.subr.bf16.mxu0 0
    %453 = vmatpush1.bf16.msra.mxu0 %v433
    %454 = vmatprep.subr.bf16.mxu0 0
    %455 = vmatpush1.bf16.msra.mxu0 %v434
    %456 = vmatprep.subr.bf16.mxu0 0
    %457 = vmatpush1.bf16.msra.mxu0 %v435
    %458 = vmatprep.subr.bf16.mxu0 0
    %459 = vmatpush1.bf16.msra.mxu0 %v436
    %460 = vmatprep.subr.bf16.mxu0 0
    %461 = vmatpush1.bf16.msra.mxu0 %v437
    %462 = vmatprep.subr.bf16.mxu0 0
    %463 = vmatpush1.bf16.msra.mxu0 0
    %464 = vmatprep.subr.bf16.mxu0 0
    %465 = vmatpush1.bf16.msra.mxu0 0
    %466 = vmatprep.subr.bf16.mxu0 0
    %467 = vmatpush1.bf16.msra.mxu0 0
    %468 = vmatprep.subr.bf16.mxu0 0
    %469 = vmatpush1.bf16.msra.mxu0 0
    %470 = vmatprep.subr.bf16.mxu0 0
    %471 = vmatpush1.bf16.msra.mxu0 0
    %472 = vmatprep.subr.bf16.mxu0 0
    %473 = vmatpush1.bf16.msra.mxu0 0
    %474 = vmatprep.subr.bf16.mxu0 0
    %475 = vmatpush1.bf16.msra.mxu0 0
    %476 = vmatprep.subr.bf16.mxu0 0
    %477 = vmatpush1.bf16.msra.mxu0 0
    %478 = vmatprep.mubr.bf16.mxu0 0
    %479 = vmatmul.mubr.bf16.gmra.mrb[0].mxu0 %v367
    %v480 = vpop.f32.mrb[0].mxu0
    %v481 = vadd.f32 %v396, %v480
    %v482 = vpop.f32.mrb[0].mxu0
    %v483 = vpop.f32.mrb[0].mxu0
    %v484 = vadd.f32 %v396, %v483
    %v485 = vpop.f32.mrb[0].mxu0
    %486 = vmatprep.mubr.bf16.mxu0 0
    %487 = vmatmul.mubr.bf16.gmra.mrb[0].mxu0 %v368
    %v488 = vpop.f32.mrb[0].mxu0
    %v489 = vadd.f32 %v396, %v488
    %v490 = vpop.f32.mrb[0].mxu0
    %v491 = vpop.f32.mrb[0].mxu0
    %v492 = vadd.f32 %v396, %v491
    %v493 = vpop.f32.mrb[0].mxu0
    %494 = vmatprep.mubr.bf16.mxu0 0
    %495 = vmatmul.mubr.bf16.gmra.mrb[0].mxu0 %v369
    %v496 = vpop.f32.mrb[0].mxu0
    %v497 = vadd.f32 %v396, %v496
    %v498 = vpop.f32.mrb[0].mxu0
    %v499 = vpop.f32.mrb[0].mxu0
    %v500 = vadd.f32 %v396, %v499
    %v501 = vpop.f32.mrb[0].mxu0
    %502 = vmatprep.mubr.bf16.mxu0 0
    %503 = vmatmul.mubr.bf16.gmra.mrb[0].mxu0 %v370
    %v504 = vpop.f32.mrb[0].mxu0
    %v505 = vadd.f32 %v396, %v504
    %v506 = vpop.f32.mrb[0].mxu0
    %v507 = vpop.f32.mrb[0].mxu0
    %v508 = vadd.f32 %v396, %v507
    %v509 = vpop.f32.mrb[0].mxu0
    %510 = vmatprep.mubr.bf16.mxu0 0
    %511 = vmatmul.mubr.bf16.gmra.mrb[0].mxu0 %v371
    %v512 = vpop.f32.mrb[0].mxu0
    %v513 = vadd.f32 %v396, %v512
    %v514 = vpop.f32.mrb[0].mxu0
    %v515 = vpop.f32.mrb[0].mxu0
    %v516 = vadd.f32 %v396, %v515
    %v517 = vpop.f32.mrb[0].mxu0
    %518 = vmatprep.mubr.bf16.mxu0 0
    %519 = vmatmul.mubr.bf16.gmra.mrb[0].mxu0 %v372
    %v520 = vpop.f32.mrb[0].mxu0
    %v521 = vadd.f32 %v396, %v520
    %v522 = vpop.f32.mrb[0].mxu0
    %v523 = vpop.f32.mrb[0].mxu0
    %v524 = vadd.f32 %v396, %v523
    %v525 = vpop.f32.mrb[0].mxu0
    %526 = vmatprep.mubr.bf16.mxu0 0
    %527 = vmatmul.mubr.bf16.gmra.mrb[0].mxu0 %v373
    %v528 = vpop.f32.mrb[0].mxu0
    %v529 = vadd.f32 %v396, %v528
    %v530 = vpop.f32.mrb[0].mxu0
    %v531 = vpop.f32.mrb[0].mxu0
    %v532 = vadd.f32 %v396, %v531
    %v533 = vpop.f32.mrb[0].mxu0
    %534 = vmatprep.mubr.bf16.mxu0 0
    %535 = vmatmul.mubr.bf16.gmra.mrb[0].mxu0 %v374
    %v536 = vpop.f32.mrb[0].mxu0
    %v537 = vadd.f32 %v396, %v536
    %v538 = vpop.f32.mrb[0].mxu0
    %v539 = vpop.f32.mrb[0].mxu0
    %v540 = vadd.f32 %v396, %v539
    %v541 = vpop.f32.mrb[0].mxu0
    %542 = vdwg.mxu0
    %v543 = vmax.f32 %v481, 0.0
    %v544 = vmax.f32 %v484, 0.0
    %v545 = vmax.f32 %v489, 0.0
    %v546 = vmax.f32 %v492, 0.0
    %v547 = vmax.f32 %v497, 0.0
    %v548 = vmax.f32 %v500, 0.0
    %v549 = vmax.f32 %v505, 0.0
    %v550 = vmax.f32 %v508, 0.0
    %v551 = vmax.f32 %v513, 0.0
    %v552 = vmax.f32 %v516, 0.0
    %v553 = vmax.f32 %v521, 0.0
    %v554 = vmax.f32 %v524, 0.0
    %v555 = vmax.f32 %v529, 0.0
    %v556 = vmax.f32 %v532, 0.0
    %v557 = vmax.f32 %v537, 0.0
    %v558 = vmax.f32 %v540, 0.0
    %v559 = vpack.c.bf16 %v544, %v543
    %v560 = vpack.c.bf16 %v546, %v545
    %v561 = vpack.c.bf16 %v548, %v547
    %v562 = vpack.c.bf16 %v550, %v549
    %v563 = vpack.c.bf16 %v552, %v551
    %v564 = vpack.c.bf16 %v554, %v553
    %v565 = vpack.c.bf16 %v556, %v555
    %v566 = vpack.c.bf16 %v558, %v557
    %v567 = vld [vmem:[#allocation5] sm:$0xff]
    %v568 = vld [vmem:[#allocation5 + $0x8] sm:$0xff]
    %v569 = vld [vmem:[#allocation5 + $0x10] sm:$0xff]
    %v570 = vld [vmem:[#allocation5 + $0x18] sm:$0xff]
    %v571 = vunpack.c.l.s8.bf16 %v567
    %v572 = vunpack.c.h.s8.bf16 %v567
    %v573 = vunpack.c.l.s8.bf16 %v568
    %v574 = vunpack.c.h.s8.bf16 %v568
    %v575 = vunpack.c.l.s8.bf16 %v569
    %v576 = vunpack.c.h.s8.bf16 %v569
    %v577 = vunpack.c.l.s8.bf16 %v570
    %v578 = vunpack.c.h.s8.bf16 %v570
    %579 = vmatprep.subr.bf16.mxu0 0
    %580 = vmatpush1.bf16.msra.mxu0 %v559
    %581 = vmatprep.subr.bf16.mxu0 0
    %582 = vmatpush1.bf16.msra.mxu0 %v560
    %583 = vmatprep.subr.bf16.mxu0 0
    %584 = vmatpush1.bf16.msra.mxu0 %v561
    %585 = vmatprep.subr.bf16.mxu0 0
    %586 = vmatpush1.bf16.msra.mxu0 %v562
    %587 = vmatprep.subr.bf16.mxu0 0
    %588 = vmatpush1.bf16.msra.mxu0 %v563
    %589 = vmatprep.subr.bf16.mxu0 0
    %590 = vmatpush1.bf16.msra.mxu0 %v564
    %591 = vmatprep.subr.bf16.mxu0 0
    %592 = vmatpush1.bf16.msra.mxu0 %v565
    %593 = vmatprep.subr.bf16.mxu0 0
    %594 = vmatpush1.bf16.msra.mxu0 %v566
    %595 = vmatprep.subr.bf16.mxu0 0
    %596 = vmatpush1.bf16.msra.mxu0 0
    %597 = vmatprep.subr.bf16.mxu0 0
    %598 = vmatpush1.bf16.msra.mxu0 0
    %599 = vmatprep.subr.bf16.mxu0 0
    %600 = vmatpush1.bf16.msra.mxu0 0
    %601 = vmatprep.subr.bf16.mxu0 0
    %602 = vmatpush1.bf16.msra.mxu0 0
    %603 = vmatprep.subr.bf16.mxu0 0
    %604 = vmatpush1.bf16.msra.mxu0 0
    %605 = vmatprep.subr.bf16.mxu0 0
    %606 = vmatpush1.bf16.msra.mxu0 0
    %607 = vmatprep.subr.bf16.mxu0 0
    %608 = vmatpush1.bf16.msra.mxu0 0
    %609 = vmatprep.subr.bf16.mxu0 0
    %610 = vmatpush1.bf16.msra.mxu0 0
    %611 = vmatprep.mubr.bf16.mxu0 0
    %612 = vmatmul.mubr.bf16.gmra.mrb[0].mxu0 %v571
    %v613 = vpop.f32.mrb[0].mxu0
    %v614 = vadd.f32 0.0, %v613
    %v615 = vpop.f32.mrb[0].mxu0
    %v616 = vpop.f32.mrb[0].mxu0
    %v617 = vadd.f32 0.0, %v616
    %v618 = vpop.f32.mrb[0].mxu0
    %619 = vmatprep.mubr.bf16.mxu0 0
    %620 = vmatmul.mubr.bf16.gmra.mrb[0].mxu0 %v572
    %v621 = vpop.f32.mrb[0].mxu0
    %v622 = vadd.f32 0.0, %v621
    %v623 = vpop.f32.mrb[0].mxu0
    %v624 = vpop.f32.mrb[0].mxu0
    %v625 = vadd.f32 0.0, %v624
    %v626 = vpop.f32.mrb[0].mxu0
    %627 = vmatprep.mubr.bf16.mxu0 0
    %628 = vmatmul.mubr.bf16.gmra.mrb[0].mxu0 %v573
    %v629 = vpop.f32.mrb[0].mxu0
    %v630 = vadd.f32 0.0, %v629
    %v631 = vpop.f32.mrb[0].mxu0
    %v632 = vpop.f32.mrb[0].mxu0
    %v633 = vadd.f32 0.0, %v632
    %v634 = vpop.f32.mrb[0].mxu0
    %635 = vmatprep.mubr.bf16.mxu0 0
    %636 = vmatmul.mubr.bf16.gmra.mrb[0].mxu0 %v574
    %v637 = vpop.f32.mrb[0].mxu0
    %v638 = vadd.f32 0.0, %v637
    %v639 = vpop.f32.mrb[0].mxu0
    %v640 = vpop.f32.mrb[0].mxu0
    %v641 = vadd.f32 0.0, %v640
    %v642 = vpop.f32.mrb[0].mxu0
    %643 = vmatprep.mubr.bf16.mxu0 0
    %644 = vmatmul.mubr.bf16.gmra.mrb[0].mxu0 %v575
    %v645 = vpop.f32.mrb[0].mxu0
    %v646 = vadd.f32 0.0, %v645
    %v647 = vpop.f32.mrb[0].mxu0
    %v648 = vpop.f32.mrb[0].mxu0
    %v649 = vadd.f32 0.0, %v648
    %v650 = vpop.f32.mrb[0].mxu0
    %651 = vmatprep.mubr.bf16.mxu0 0
    %652 = vmatmul.mubr.bf16.gmra.mrb[0].mxu0 %v576
    %v653 = vpop.f32.mrb[0].mxu0
    %v654 = vadd.f32 0.0, %v653
    %v655 = vpop.f32.mrb[0].mxu0
    %v656 = vpop.f32.mrb[0].mxu0
    %v657 = vadd.f32 0.0, %v656
    %v658 = vpop.f32.mrb[0].mxu0
    %659 = vmatprep.mubr.bf16.mxu0 0
    %660 = vmatmul.mubr.bf16.gmra.mrb[0].mxu0 %v577
    %v661 = vpop.f32.mrb[0].mxu0
    %v662 = vadd.f32 0.0, %v661
    %v663 = vpop.f32.mrb[0].mxu0
    %v664 = vpop.f32.mrb[0].mxu0
    %v665 = vadd.f32 0.0, %v664
    %v666 = vpop.f32.mrb[0].mxu0
    %667 = vmatprep.mubr.bf16.mxu0 0
    %668 = vmatmul.mubr.bf16.gmra.mrb[0].mxu0 %v578
    %v669 = vpop.f32.mrb[0].mxu0
    %v670 = vadd.f32 0.0, %v669
    %v671 = vpop.f32.mrb[0].mxu0
    %v672 = vpop.f32.mrb[0].mxu0
    %v673 = vadd.f32 0.0, %v672
    %v674 = vpop.f32.mrb[0].mxu0
    %675 = vdwg.mxu0
    %v676 = vpack.c.bf16 %v617, %v614
    %v677 = vpack.c.bf16 %v625, %v622
    %v678 = vpack.c.bf16 %v633, %v630
    %v679 = vpack.c.bf16 %v641, %v638
    %v680 = vpack.c.bf16 %v649, %v646
    %v681 = vpack.c.bf16 %v657, %v654
    %v682 = vpack.c.bf16 %v665, %v662
    %v683 = vpack.c.bf16 %v673, %v670
    %v684 = vld [vmem:[#allocation10] sm:$0xf]
    %v685 = vld [vmem:[#allocation10 + $0x4] sm:$0xf]
    %v686 = vld [vmem:[#allocation10 + $0x8] sm:$0xf]
    %v687 = vld [vmem:[#allocation10 + $0xc] sm:$0xf]
    %v688 = vld [vmem:[#allocation10 + $0x10] sm:$0xf]
    %v689 = vld [vmem:[#allocation10 + $0x14] sm:$0xf]
    %v690 = vld [vmem:[#allocation10 + $0x18] sm:$0xf]
    %v691 = vld [vmem:[#allocation10 + $0x1c] sm:$0xf]
    %v692 = vld [vmem:[#allocation10 + $0x20] sm:$0xf]
    %v693 = vld [vmem:[#allocation10 + $0x24] sm:$0xf]
    %v694 = vld [vmem:[#allocation10 + $0x28] sm:$0xf]
    %v695 = vld [vmem:[#allocation10 + $0x2c] sm:$0xf]
    %v696 = vld [vmem:[#allocation10 + $0x30] sm:$0xf]
    %v697 = vld [vmem:[#allocation10 + $0x34] sm:$0xf]
    %v698 = vld [vmem:[#allocation10 + $0x38] sm:$0xf]
    %v699 = vld [vmem:[#allocation10 + $0x3c] sm:$0xf]
    %v700 = vld [vmem:[%s7] sm:$0x1]
    %v702 = vlaneseq
    %v703 = vshrl.u32 %v702, 7
    %v704 = vsub.s32 0, %v703
    %v705 = vrot.slane %v700, %v704
    %v723 = vunpack.c.l.b16 %v684
    %v724 = vunpack.c.l.b16 %v685
    %v725 = vunpack.c.l.b16 %v686
    %v726 = vunpack.c.l.b16 %v687
    %v727 = vunpack.c.l.b16 %v688
    %v728 = vunpack.c.l.b16 %v689
    %v729 = vunpack.c.l.b16 %v690
    %v730 = vunpack.c.l.b16 %v691
    %v731 = vunpack.c.l.b16 %v692
    %v732 = vunpack.c.l.b16 %v693
    %v733 = vunpack.c.l.b16 %v694
    %v734 = vunpack.c.l.b16 %v695
    %v735 = vunpack.c.l.b16 %v696
    %v736 = vunpack.c.l.b16 %v697
    %v737 = vunpack.c.l.b16 %v698
    %v738 = vunpack.c.l.b16 %v699
    %v739 = vpack.c.b16 %v724, %v723
    %v740 = vpack.c.b16 %v726, %v725
    %v741 = vpack.c.b16 %v728, %v727
    %v742 = vpack.c.b16 %v730, %v729
    %v743 = vpack.c.b16 %v732, %v731
    %v744 = vpack.c.b16 %v734, %v733
    %v745 = vpack.c.b16 %v736, %v735
    %v746 = vpack.c.b16 %v738, %v737
    %755 = vmatprep.subr.bf16.mxu0 0
    %756 = vmatpush1.bf16.msra.mxu0 %v739
    %757 = vmatprep.subr.bf16.mxu0 0
    %758 = vmatpush1.bf16.msra.mxu0 %v740
    %759 = vmatprep.subr.bf16.mxu0 0
    %760 = vmatpush1.bf16.msra.mxu0 %v741
    %761 = vmatprep.subr.bf16.mxu0 0
    %762 = vmatpush1.bf16.msra.mxu0 %v742
    %763 = vmatprep.subr.bf16.mxu0 0
    %764 = vmatpush1.bf16.msra.mxu0 %v743
    %765 = vmatprep.subr.bf16.mxu0 0
    %766 = vmatpush1.bf16.msra.mxu0 %v744
    %767 = vmatprep.subr.bf16.mxu0 0
    %768 = vmatpush1.bf16.msra.mxu0 %v745
    %769 = vmatprep.subr.bf16.mxu0 0
    %770 = vmatpush1.bf16.msra.mxu0 %v746
    %771 = vmatprep.subr.bf16.mxu0 0
    %772 = vmatpush1.bf16.msra.mxu0 0
    %773 = vmatprep.subr.bf16.mxu0 0
    %774 = vmatpush1.bf16.msra.mxu0 0
    %775 = vmatprep.subr.bf16.mxu0 0
    %776 = vmatpush1.bf16.msra.mxu0 0
    %777 = vmatprep.subr.bf16.mxu0 0
    %778 = vmatpush1.bf16.msra.mxu0 0
    %779 = vmatprep.subr.bf16.mxu0 0
    %780 = vmatpush1.bf16.msra.mxu0 0
    %781 = vmatprep.subr.bf16.mxu0 0
    %782 = vmatpush1.bf16.msra.mxu0 0
    %783 = vmatprep.subr.bf16.mxu0 0
    %784 = vmatpush1.bf16.msra.mxu0 0
    %785 = vmatprep.subr.bf16.mxu0 0
    %786 = vmatpush1.bf16.msra.mxu0 0
    %787 = vmatprep.mubr.bf16.mxu0 0
    %788 = vmatmul.mubr.bf16.gmra.mrb[0].mxu0 %v676
    %v789 = vpop.f32.mrb[0].mxu0
    %v790 = vadd.f32 %v705, %v789
    %v791 = vpop.f32.mrb[0].mxu0
    %v792 = vpop.f32.mrb[0].mxu0
    %v793 = vadd.f32 %v705, %v792
    %v794 = vpop.f32.mrb[0].mxu0
    %795 = vmatprep.mubr.bf16.mxu0 0
    %796 = vmatmul.mubr.bf16.gmra.mrb[0].mxu0 %v677
    %v797 = vpop.f32.mrb[0].mxu0
    %v798 = vadd.f32 %v705, %v797
    %v799 = vpop.f32.mrb[0].mxu0
    %v800 = vpop.f32.mrb[0].mxu0
    %v801 = vadd.f32 %v705, %v800
    %v802 = vpop.f32.mrb[0].mxu0
    %803 = vmatprep.mubr.bf16.mxu0 0
    %804 = vmatmul.mubr.bf16.gmra.mrb[0].mxu0 %v678
    %v805 = vpop.f32.mrb[0].mxu0
    %v806 = vadd.f32 %v705, %v805
    %v807 = vpop.f32.mrb[0].mxu0
    %v808 = vpop.f32.mrb[0].mxu0
    %v809 = vadd.f32 %v705, %v808
    %v810 = vpop.f32.mrb[0].mxu0
    %811 = vmatprep.mubr.bf16.mxu0 0
    %812 = vmatmul.mubr.bf16.gmra.mrb[0].mxu0 %v679
    %v813 = vpop.f32.mrb[0].mxu0
    %v814 = vadd.f32 %v705, %v813
    %v815 = vpop.f32.mrb[0].mxu0
    %v816 = vpop.f32.mrb[0].mxu0
    %v817 = vadd.f32 %v705, %v816
    %v818 = vpop.f32.mrb[0].mxu0
    %819 = vmatprep.mubr.bf16.mxu0 0
    %820 = vmatmul.mubr.bf16.gmra.mrb[0].mxu0 %v680
    %v821 = vpop.f32.mrb[0].mxu0
    %v822 = vadd.f32 %v705, %v821
    %v823 = vpop.f32.mrb[0].mxu0
    %v824 = vpop.f32.mrb[0].mxu0
    %v825 = vadd.f32 %v705, %v824
    %v826 = vpop.f32.mrb[0].mxu0
    %827 = vmatprep.mubr.bf16.mxu0 0
    %828 = vmatmul.mubr.bf16.gmra.mrb[0].mxu0 %v681
    %v829 = vpop.f32.mrb[0].mxu0
    %v830 = vadd.f32 %v705, %v829
    %v831 = vpop.f32.mrb[0].mxu0
    %v832 = vpop.f32.mrb[0].mxu0
    %v833 = vadd.f32 %v705, %v832
    %v834 = vpop.f32.mrb[0].mxu0
    %835 = vmatprep.mubr.bf16.mxu0 0
    %836 = vmatmul.mubr.bf16.gmra.mrb[0].mxu0 %v682
    %v837 = vpop.f32.mrb[0].mxu0
    %v838 = vadd.f32 %v705, %v837
    %v839 = vpop.f32.mrb[0].mxu0
    %v840 = vpop.f32.mrb[0].mxu0
    %v841 = vadd.f32 %v705, %v840
    %v842 = vpop.f32.mrb[0].mxu0
    %843 = vmatprep.mubr.bf16.mxu0 0
    %844 = vmatmul.mubr.bf16.gmra.mrb[0].mxu0 %v683
    %v845 = vpop.f32.mrb[0].mxu0
    %v846 = vadd.f32 %v705, %v845
    %v847 = vpop.f32.mrb[0].mxu0
    %v848 = vpop.f32.mrb[0].mxu0
    %v849 = vadd.f32 %v705, %v848
    %v850 = vpop.f32.mrb[0].mxu0
    %851 = vdwg.mxu0
    %v852 = vmax.f32 %v790, 0.0
    %v853 = vmax.f32 %v793, 0.0
    %v854 = vmax.f32 %v798, 0.0
    %v855 = vmax.f32 %v801, 0.0
    %v856 = vmax.f32 %v806, 0.0
    %v857 = vmax.f32 %v809, 0.0
    %v858 = vmax.f32 %v814, 0.0
    %v859 = vmax.f32 %v817, 0.0
    %v860 = vmax.f32 %v822, 0.0
    %v861 = vmax.f32 %v825, 0.0
    %v862 = vmax.f32 %v830, 0.0
    %v863 = vmax.f32 %v833, 0.0
    %v864 = vmax.f32 %v838, 0.0
    %v865 = vmax.f32 %v841, 0.0
    %v866 = vmax.f32 %v846, 0.0
    %v867 = vmax.f32 %v849, 0.0
    %v868 = vpack.c.bf16 %v853, %v852
    %v869 = vpack.c.bf16 %v855, %v854
    %v870 = vpack.c.bf16 %v857, %v856
    %v871 = vpack.c.bf16 %v859, %v858
    %v872 = vpack.c.bf16 %v861, %v860
    %v873 = vpack.c.bf16 %v863, %v862
    %v874 = vpack.c.bf16 %v865, %v864
    %v875 = vpack.c.bf16 %v867, %v866
    %v876 = vld [vmem:[#allocation11] sm:$0xf]
    %v877 = vld [vmem:[#allocation11 + $0x4] sm:$0xf]
    %v878 = vld [vmem:[#allocation11 + $0x8] sm:$0xf]
    %v879 = vld [vmem:[#allocation11 + $0xc] sm:$0xf]
    %v880 = vld [vmem:[#allocation11 + $0x10] sm:$0xf]
    %v881 = vld [vmem:[#allocation11 + $0x14] sm:$0xf]
    %v882 = vld [vmem:[#allocation11 + $0x18] sm:$0xf]
    %v883 = vld [vmem:[#allocation11 + $0x1c] sm:$0xf]
    %v884 = vld [vmem:[#allocation11 + $0x20] sm:$0xf]
    %v885 = vld [vmem:[#allocation11 + $0x24] sm:$0xf]
    %v886 = vld [vmem:[#allocation11 + $0x28] sm:$0xf]
    %v887 = vld [vmem:[#allocation11 + $0x2c] sm:$0xf]
    %v888 = vld [vmem:[#allocation11 + $0x30] sm:$0xf]
    %v889 = vld [vmem:[#allocation11 + $0x34] sm:$0xf]
    %v890 = vld [vmem:[#allocation11 + $0x38] sm:$0xf]
    %v891 = vld [vmem:[#allocation11 + $0x3c] sm:$0xf]
    %v892 = vld [vmem:[%s9] sm:$0x1]
    %v894 = vlaneseq
    %v895 = vshrl.u32 %v894, 7
    %v896 = vsub.s32 0, %v895
    %v897 = vrot.slane %v892, %v896
    %v915 = vunpack.c.l.b16 %v876
    %v916 = vunpack.c.l.b16 %v877
    %v917 = vunpack.c.l.b16 %v878
    %v918 = vunpack.c.l.b16 %v879
    %v919 = vunpack.c.l.b16 %v880
    %v920 = vunpack.c.l.b16 %v881
    %v921 = vunpack.c.l.b16 %v882
    %v922 = vunpack.c.l.b16 %v883
    %v923 = vunpack.c.l.b16 %v884
    %v924 = vunpack.c.l.b16 %v885
    %v925 = vunpack.c.l.b16 %v886
    %v926 = vunpack.c.l.b16 %v887
    %v927 = vunpack.c.l.b16 %v888
    %v928 = vunpack.c.l.b16 %v889
    %v929 = vunpack.c.l.b16 %v890
    %v930 = vunpack.c.l.b16 %v891
    %v931 = vpack.c.b16 %v916, %v915
    %v932 = vpack.c.b16 %v918, %v917
    %v933 = vpack.c.b16 %v920, %v919
    %v934 = vpack.c.b16 %v922, %v921
    %v935 = vpack.c.b16 %v924, %v923
    %v936 = vpack.c.b16 %v926, %v925
    %v937 = vpack.c.b16 %v928, %v927
    %v938 = vpack.c.b16 %v930, %v929
    %947 = vmatprep.subr.bf16.mxu0 0
    %948 = vmatpush1.bf16.msra.mxu0 %v931
    %949 = vmatprep.subr.bf16.mxu0 0
    %950 = vmatpush1.bf16.msra.mxu0 %v932
    %951 = vmatprep.subr.bf16.mxu0 0
    %952 = vmatpush1.bf16.msra.mxu0 %v933
    %953 = vmatprep.subr.bf16.mxu0 0
    %954 = vmatpush1.bf16.msra.mxu0 %v934
    %955 = vmatprep.subr.bf16.mxu0 0
    %956 = vmatpush1.bf16.msra.mxu0 %v935
    %957 = vmatprep.subr.bf16.mxu0 0
    %958 = vmatpush1.bf16.msra.mxu0 %v936
    %959 = vmatprep.subr.bf16.mxu0 0
    %960 = vmatpush1.bf16.msra.mxu0 %v937
    %961 = vmatprep.subr.bf16.mxu0 0
    %962 = vmatpush1.bf16.msra.mxu0 %v938
    %963 = vmatprep.subr.bf16.mxu0 0
    %964 = vmatpush1.bf16.msra.mxu0 0
    %965 = vmatprep.subr.bf16.mxu0 0
    %966 = vmatpush1.bf16.msra.mxu0 0
    %967 = vmatprep.subr.bf16.mxu0 0
    %968 = vmatpush1.bf16.msra.mxu0 0
    %969 = vmatprep.subr.bf16.mxu0 0
    %970 = vmatpush1.bf16.msra.mxu0 0
    %971 = vmatprep.subr.bf16.mxu0 0
    %972 = vmatpush1.bf16.msra.mxu0 0
    %973 = vmatprep.subr.bf16.mxu0 0
    %974 = vmatpush1.bf16.msra.mxu0 0
    %975 = vmatprep.subr.bf16.mxu0 0
    %976 = vmatpush1.bf16.msra.mxu0 0
    %977 = vmatprep.subr.bf16.mxu0 0
    %978 = vmatpush1.bf16.msra.mxu0 0
    %979 = vmatprep.mubr.bf16.mxu0 0
    %980 = vmatmul.mubr.bf16.gmra.mrb[0].mxu0 %v868
    %v981 = vpop.f32.mrb[0].mxu0
    %v982 = vadd.f32 %v897, %v981
    %v983 = vpop.f32.mrb[0].mxu0
    %v984 = vpop.f32.mrb[0].mxu0
    %v985 = vadd.f32 %v897, %v984
    %v986 = vpop.f32.mrb[0].mxu0
    %987 = vmatprep.mubr.bf16.mxu0 0
    %988 = vmatmul.mubr.bf16.gmra.mrb[0].mxu0 %v869
    %v989 = vpop.f32.mrb[0].mxu0
    %v990 = vadd.f32 %v897, %v989
    %v991 = vpop.f32.mrb[0].mxu0
    %v992 = vpop.f32.mrb[0].mxu0
    %v993 = vadd.f32 %v897, %v992
    %v994 = vpop.f32.mrb[0].mxu0
    %995 = vmatprep.mubr.bf16.mxu0 0
    %996 = vmatmul.mubr.bf16.gmra.mrb[0].mxu0 %v870
    %v997 = vpop.f32.mrb[0].mxu0
    %v998 = vadd.f32 %v897, %v997
    %v999 = vpop.f32.mrb[0].mxu0
    %v1000 = vpop.f32.mrb[0].mxu0
    %v1001 = vadd.f32 %v897, %v1000
    %v1002 = vpop.f32.mrb[0].mxu0
    %1003 = vmatprep.mubr.bf16.mxu0 0
    %1004 = vmatmul.mubr.bf16.gmra.mrb[0].mxu0 %v871
    %v1005 = vpop.f32.mrb[0].mxu0
    %v1006 = vadd.f32 %v897, %v1005
    %v1007 = vpop.f32.mrb[0].mxu0
    %v1008 = vpop.f32.mrb[0].mxu0
    %v1009 = vadd.f32 %v897, %v1008
    %v1010 = vpop.f32.mrb[0].mxu0
    %1011 = vmatprep.mubr.bf16.mxu0 0
    %1012 = vmatmul.mubr.bf16.gmra.mrb[0].mxu0 %v872
    %v1013 = vpop.f32.mrb[0].mxu0
    %v1014 = vadd.f32 %v897, %v1013
    %v1015 = vpop.f32.mrb[0].mxu0
    %v1016 = vpop.f32.mrb[0].mxu0
    %v1017 = vadd.f32 %v897, %v1016
    %v1018 = vpop.f32.mrb[0].mxu0
    %1019 = vmatprep.mubr.bf16.mxu0 0
    %1020 = vmatmul.mubr.bf16.gmra.mrb[0].mxu0 %v873
    %v1021 = vpop.f32.mrb[0].mxu0
    %v1022 = vadd.f32 %v897, %v1021
    %v1023 = vpop.f32.mrb[0].mxu0
    %v1024 = vpop.f32.mrb[0].mxu0
    %v1025 = vadd.f32 %v897, %v1024
    %v1026 = vpop.f32.mrb[0].mxu0
    %1027 = vmatprep.mubr.bf16.mxu0 0
    %1028 = vmatmul.mubr.bf16.gmra.mrb[0].mxu0 %v874
    %v1029 = vpop.f32.mrb[0].mxu0
    %v1030 = vadd.f32 %v897, %v1029
    %v1031 = vpop.f32.mrb[0].mxu0
    %v1032 = vpop.f32.mrb[0].mxu0
    %v1033 = vadd.f32 %v897, %v1032
    %v1034 = vpop.f32.mrb[0].mxu0
    %1035 = vmatprep.mubr.bf16.mxu0 0
    %1036 = vmatmul.mubr.bf16.gmra.mrb[0].mxu0 %v875
    %v1037 = vpop.f32.mrb[0].mxu0
    %v1038 = vadd.f32 %v897, %v1037
    %v1039 = vpop.f32.mrb[0].mxu0
    %v1040 = vpop.f32.mrb[0].mxu0
    %v1041 = vadd.f32 %v897, %v1040
    %v1042 = vpop.f32.mrb[0].mxu0
    %1043 = vdwg.mxu0
    %v1044 = vmax.f32 %v982, 0.0
    %v1045 = vmax.f32 %v985, 0.0
    %v1046 = vmax.f32 %v990, 0.0
    %v1047 = vmax.f32 %v993, 0.0
    %v1048 = vmax.f32 %v998, 0.0
    %v1049 = vmax.f32 %v1001, 0.0
    %v1050 = vmax.f32 %v1006, 0.0
    %v1051 = vmax.f32 %v1009, 0.0
    %v1052 = vmax.f32 %v1014, 0.0
    %v1053 = vmax.f32 %v1017, 0.0
    %v1054 = vmax.f32 %v1022, 0.0
    %v1055 = vmax.f32 %v1025, 0.0
    %v1056 = vmax.f32 %v1030, 0.0
    %v1057 = vmax.f32 %v1033, 0.0
    %v1058 = vmax.f32 %v1038, 0.0
    %v1059 = vmax.f32 %v1041, 0.0
    %1060 = vst [vmem:[#allocation13] sm:$0xff] %v1044
    %1061 = vst [vmem:[#allocation13 + $0x8] sm:$0xff] %v1045
    %1062 = vst [vmem:[#allocation13 + $0x10] sm:$0xff] %v1046
    %1063 = vst [vmem:[#allocation13 + $0x18] sm:$0xff] %v1047
    %1064 = vst [vmem:[#allocation13 + $0x20] sm:$0xff] %v1048
    %1065 = vst [vmem:[#allocation13 + $0x28] sm:$0xff] %v1049
    %1066 = vst [vmem:[#allocation13 + $0x30] sm:$0xff] %v1050
    %1067 = vst [vmem:[#allocation13 + $0x38] sm:$0xff] %v1051
    %1068 = vst [vmem:[#allocation13 + $0x40] sm:$0xff] %v1052
    %1069 = vst [vmem:[#allocation13 + $0x48] sm:$0xff] %v1053
    %1070 = vst [vmem:[#allocation13 + $0x50] sm:$0xff] %v1054
    %1071 = vst [vmem:[#allocation13 + $0x58] sm:$0xff] %v1055
    %1072 = vst [vmem:[#allocation13 + $0x60] sm:$0xff] %v1056
    %1073 = vst [vmem:[#allocation13 + $0x68] sm:$0xff] %v1057
    %1074 = vst [vmem:[#allocation13 + $0x70] sm:$0xff] %v1058
    %1075 = vst [vmem:[#allocation13 + $0x78] sm:$0xff] %v1059
    // Predicated region
    $region66: #{tpu_custom_call.1} parent=1 // pred_check
      _
    $region67: #{tpu_custom_call.1} parent=1 // pred_check_branch
      %1077 = sbr.rel (0) target = $region69
    $region68: #{tpu_custom_call.1} parent=1 // pred_region
      %s1079 = ssub.s32 2048, 2048
      %1080 = vsyncadd [#allocation4], %s1079
      %s1081 = sshll.u32 [#allocation13], 4
      %s1082 = int_to_ptr.vmem [resolvable:$true] %s1081
      %1087 = dma.vmem_to_hbm [thread:$0]  %s1082, 2048, %s10, [#allocation4], 128, 128, 8
    $region69: #{tpu_custom_call.1} parent=1 // pred_fallthru
      _
    // Predicated region
    $region70: #{tpu_custom_call.1} parent=1 // pred_check
      _
    $region71: #{tpu_custom_call.1} parent=1 // pred_check_branch
      %1089 = sbr.rel (0) target = $region73
    $region72: #{tpu_custom_call.1} parent=1 // pred_region
      %1090 = dma.done [#allocation4], 2048
    $region73: #{tpu_custom_call.1} parent=1 // pred_fallthru
      _
    %1091 = vsyncpa [#allocation3], 1
    %1092 = vsyncpa [#allocation6], 1
    %1093 = vsyncpa [#allocation9], 1
    %1094 = vsyncpa [#allocation12], 1
    %1095 = vsyncpa [#allocation4], 1

</llo_original>
